<compile_context>
chip_gen: v6e
topology: v6e:2x2x1
jax: 0.10.0
libtpu: 0.0.40
codegen_flags: <defaults>
</compile_context>

<pallas_src>
import functools

import jax
import jax.numpy as jnp
from jax.experimental import pallas as pl
from jax.experimental.pallas import tpu as pltpu


# ----------------------------- kernels ------------------------------------ #

def _rmsnorm_affine_kernel(x_ref, w_ref, o_ref, *, eps: float):
    # x_ref: (tile_rows, hidden), w_ref: (1, hidden), o_ref: (tile_rows, hidden)
    # Pass 1: reduction (upcast to f32 for the sum of squares).
    x = x_ref[...].astype(jnp.float32)
    ms = jnp.mean(x * x, axis=-1, keepdims=True)            # (tile_rows, 1)
    inv = jax.lax.rsqrt(ms + eps)
    # Pass 2: re-read x_ref for scale + store so the f32 copy from pass 1 does
    # not need to stay live across the reduction (VMEM headroom on v7x).
    x2 = x_ref[...].astype(jnp.float32)
    y = x2 * inv * w_ref[...].astype(jnp.float32)            # broadcast (1, hidden)
    o_ref[...] = y.astype(o_ref.dtype)


def _rmsnorm_plain_kernel(x_ref, o_ref, *, eps: float):
    # No elementwise affine: skip the weight DMA and the per-element multiply.
    x = x_ref[...].astype(jnp.float32)
    ms = jnp.mean(x * x, axis=-1, keepdims=True)
    inv = jax.lax.rsqrt(ms + eps)
    x2 = x_ref[...].astype(jnp.float32)
    o_ref[...] = (x2 * inv).astype(o_ref.dtype)


# ----------------------------- sizing helpers ------------------------------ #

def _round_up(v: int, m: int) -> int:
    return ((v + m - 1) // m) * m


def _vmem_capacity_bytes() -> int:
    """Physical VMEM per TensorCore, with a conservative fallback."""
    try:
        info = pltpu.get_tpu_info()
        cap = getattr(info, "vmem_capacity_bytes", None)
        if cap:
            return int(cap)
    except Exception:
        pass
    return 64 << 20  # conservative (v7x per-TC VMEM); v5e/v6e have 128 MiB


def _pick_tile_rows(rows: int, hidden: int, dtype, requested, vmem_cap: int) -> int:
    """Pick a sublane-aligned row tile sized from the chip's VMEM capacity."""
    itemsize = jnp.dtype(dtype).itemsize
    packing = 8 * max(1, 4 // itemsize)     # sublane packing: 8 f32, 16 bf16, 32 int8
    rows_rounded = _round_up(rows, packing)

    if requested is not None:
        tile = _round_up(max(1, int(requested)), packing)
        return int(min(tile, rows_rounded))

    # ~vmem_cap/12 per input block: ~5.3 MiB on v7x (64 MiB VMEM), 8 MiB cap on
    # v5e/v6e (128 MiB).  Big blocks amortize the ~0.35 us per-grid-step cost.
    target_bytes = max(1 << 20, min(8 << 20, vmem_cap // 12))
    tile = max(packing, target_bytes // max(1, hidden * itemsize))
    tile = _round_up(tile, packing)
    tile = min(tile, rows_rounded)

    # Prefer >= 4 grid steps (>= 2 per TensorCore on v7x) when rows allow, so
    # each core's double-buffered pipeline has work to overlap with.
    min_steps = 4
    if rows_rounded >= min_steps * packing:
        quarter = (rows_rounded // min_steps) // packing * packing
        if quarter >= packing:
            tile = min(tile, quarter)
    return int(tile)


# ----------------------------- public wrapper ------------------------------ #

def rmsnorm(x: jax.Array, weight=None, eps: float = 1e-6,
            elementwise_affine: bool = True, tile_rows=None) -> jax.Array:
    """RMSNorm over the last axis of x.

    weight (when given) must have exactly `hidden` elements (the typical
    normalized_shape=[hidden] case).  Hidden sizes that are multiples of 128
    use the lanes fully; smaller hidden still works but wastes lanes.
    """
    # TODO(synk): multi-dim normalized_shape weights (weight.size != hidden) are
    # not handled; only the per-hidden-vector case is implemented.
    orig_shape = x.shape
    hidden = orig_shape[-1]
    x2d = x.reshape(-1, hidden)
    rows = x2d.shape[0]

    vmem_cap = _vmem_capacity_bytes()
    tile = _pick_tile_rows(rows, hidden, x.dtype, tile_rows, vmem_cap)
    grid = (pl.cdiv(rows, tile),)

    # VMEM budget: 2x double-buffered in + 2x out blocks, ~2 f32 tiles of
    # temporary headroom, weight, slack — clamped to ~0.8x of physical VMEM.
    itemsize = jnp.dtype(x.dtype).itemsize
    io_block = tile * hidden * itemsize
    f32_block = tile * hidden * 4
    budget = 4 * io_block + 2 * f32_block + 4 * hidden * 4 + (2 << 20)
    vmem_bytes = int(min(max(budget, 16 << 20), int(0.8 * vmem_cap)))

    compiler_params = pltpu.CompilerParams(
        dimension_semantics=("parallel",),
        vmem_limit_bytes=vmem_bytes,
    )
    out_shape = jax.ShapeDtypeStruct((rows, hidden), x.dtype)
    x_spec = pl.BlockSpec((tile, hidden), lambda i: (i, 0))
    o_spec = pl.BlockSpec((tile, hidden), lambda i: (i, 0))

    use_affine = elementwise_affine and weight is not None
    if use_affine:
        # Constant block index (0, 0): Mosaic keeps the weight resident instead
        # of re-DMA'ing it each grid step.
        w2d = jnp.asarray(weight).reshape(1, hidden)
        out = pl.pallas_call(
            functools.partial(_rmsnorm_affine_kernel, eps=eps),
            out_shape=out_shape,
            grid_spec=pltpu.PrefetchScalarGridSpec(
                num_scalar_prefetch=0,
                grid=grid,
                in_specs=[
                    x_spec,
                    pl.BlockSpec((1, hidden), lambda i: (0, 0)),
                ],
                out_specs=o_spec,
            ),
            compiler_params=compiler_params,
        )(x2d, w2d)
    else:
        # Covers elementwise_affine=False and the "affine but weight is all-ones
        # default" case (weight=None): mathematically identical, one less DMA
        # and one less per-element multiply.
        out = pl.pallas_call(
            functools.partial(_rmsnorm_plain_kernel, eps=eps),
            out_shape=out_shape,
            grid_spec=pltpu.PrefetchScalarGridSpec(
                num_scalar_prefetch=0,
                grid=grid,
                in_specs=[x_spec],
                out_specs=o_spec,
            ),
            compiler_params=compiler_params,
        )(x2d)

    return out.reshape(orig_shape)


# ----------------------------- self-test ----------------------------------- #

if __name__ == "__main__":
    key = jax.random.PRNGKey(0)

    # Small but lane-aligned shapes (hidden multiple of 128).
    batch, seq, hidden = 2, 8, 128
    x = jax.random.normal(key, (batch, seq, hidden), dtype=jnp.float32)
    weight = (1.0 + 0.1 * jax.random.normal(jax.random.PRNGKey(0), (hidden,),
                                            dtype=jnp.float32))

    y = jax.block_until_ready(rmsnorm(x, weight, eps=1e-6, elementwise_affine=True))
    ref = x * jax.lax.rsqrt(jnp.mean(x * x, axis=-1, keepdims=True) + 1e-6) * weight
    assert jnp.allclose(y, ref, atol=1e-5, rtol=1e-5), "affine mismatch vs reference"

    # No-affine path + ragged row count (rows not a multiple of the sublane tile).
    x2 = jax.random.normal(jax.random.PRNGKey(0), (20, hidden), dtype=jnp.float32)
    y2 = jax.block_until_ready(rmsnorm(x2, None, eps=1e-6, elementwise_affine=False))
    ref2 = x2 * jax.lax.rsqrt(jnp.mean(x2 * x2, axis=-1, keepdims=True) + 1e-6)
    assert jnp.allclose(y2, ref2, atol=1e-5, rtol=1e-5), "plain mismatch vs reference"

    # Affine=True with default (ones) weight dispatches to the weight-free kernel.
    y3 = jax.block_until_ready(rmsnorm(x2, None, eps=1e-6, elementwise_affine=True))
    assert jnp.allclose(y3, ref2, atol=1e-5, rtol=1e-5), "default-weight mismatch"

    print("KERNEL_OK")
</pallas_src>

<mosaic_0001>
module attributes {stable_mosaic.version = 11 : i64} {
  func.func @_rmsnorm_affine_kernel(%arg0: i32, %arg1: memref<16x128xf32, #tpu.memory_space<vmem>>, %arg2: memref<1x128xf32, #tpu.memory_space<vmem>>, %arg3: memref<16x128xf32, #tpu.memory_space<vmem>>) attributes {dimension_semantics = [#tpu.dimension_semantics<parallel>], iteration_bounds = array<i64: 1>, scalar_prefetch = 0 : i64, scratch_operands = 0 : i64, tpu.core_type = #tpu.core_type<tc>, window_params = [{transform_indices = @transform_0, window_bounds = array<i64: 16, 128>}, {pipeline_mode = #tpu.pipeline_mode<synchronous>, transform_indices = @transform_1, window_bounds = array<i64: 1, 128>}, {transform_indices = @transform_2, window_bounds = array<i64: 16, 128>}]} {
    %c0 = arith.constant 0 : index
    %c0_0 = arith.constant 0 : index
    %0 = vector.load %arg1[%c0, %c0_0] : memref<16x128xf32, #tpu.memory_space<vmem>>, vector<16x128xf32>
    %1 = arith.mulf %0, %0 : vector<16x128xf32>
    %cst = arith.constant dense<0.000000e+00> : vector<16xf32>
    %2 = vector.multi_reduction <add>, %1, %cst [1] : vector<16x128xf32> to vector<16xf32>
    %3 = vector.shape_cast %2 : vector<16xf32> to vector<16x1xf32>
    %cst_1 = arith.constant 1.280000e+02 : f32
    %4 = vector.broadcast %cst_1 : f32 to vector<16x1xf32>
    %5 = arith.divf %3, %4 : vector<16x1xf32>
    %cst_2 = arith.constant 9.99999997E-7 : f32
    %6 = vector.broadcast %cst_2 : f32 to vector<16x1xf32>
    %7 = arith.addf %5, %6 : vector<16x1xf32>
    %8 = math.rsqrt %7 : vector<16x1xf32>
    %c0_3 = arith.constant 0 : index
    %c0_4 = arith.constant 0 : index
    %9 = vector.load %arg1[%c0_3, %c0_4] : memref<16x128xf32, #tpu.memory_space<vmem>>, vector<16x128xf32>
    %10 = vector.broadcast %8 : vector<16x1xf32> to vector<16x128xf32>
    %11 = arith.mulf %9, %10 : vector<16x128xf32>
    %c0_5 = arith.constant 0 : index
    %c0_6 = arith.constant 0 : index
    %12 = vector.load %arg2[%c0_5, %c0_6] : memref<1x128xf32, #tpu.memory_space<vmem>>, vector<1x128xf32>
    %13 = vector.broadcast %12 : vector<1x128xf32> to vector<16x128xf32>
    %14 = arith.mulf %11, %13 : vector<16x128xf32>
    %c0_7 = arith.constant 0 : index
    %c0_8 = arith.constant 0 : index
    %15 = vector.load %arg3[%c0_7, %c0_8] : memref<16x128xf32, #tpu.memory_space<vmem>>, vector<16x128xf32>
    tpu.vector_store %arg3[%c0_7, %c0_8], %14 {strides = array<i32>} : memref<16x128xf32, #tpu.memory_space<vmem>>, vector<16x128xf32>,
    return
  }
  func.func @transform_0(%arg0: i32) -> (i32, i32) {
    %c0_i32 = arith.constant 0 : i32
    %c0_i32_0 = arith.constant 0 : i32
    return %arg0, %c0_i32 : i32, i32
  }
  func.func @transform_1(%arg0: i32) -> (i32, i32) {
    %c0_i32 = arith.constant 0 : i32
    %c0_i32_0 = arith.constant 0 : i32
    %c0_i32_1 = arith.constant 0 : i32
    return %c0_i32, %c0_i32_0 : i32, i32
  }
  func.func @transform_2(%arg0: i32) -> (i32, i32) {
    %c0_i32 = arith.constant 0 : i32
    %c0_i32_0 = arith.constant 0 : i32
    return %arg0, %c0_i32 : i32, i32
  }
}

</mosaic_0001>

<llo_original>
// kernel: tpu_custom_call.1
$region0: #{tpu_custom_call.1}
  #allocation0 [shape = 'u32[]', space=smem, size = 0x4, offset = 0x4, fixed_abs, tag = 'smem constant byte address 0x4 - core index']
  #allocation1 [shape = 'u32[144,128]{1,0:T(1,128)}', space=vmem, size = 0x12000, scoped, tag = 'internal scratch']
  %s0 = inlined_call_operand.hbm [shape: f32[16,128], index: 0, kind: input, shape index: {}]
  %s1 = inlined_call_operand.vmem [shape: f32[1,128], index: 1, kind: input, shape index: {}]
  %s2 = inlined_call_operand.hbm [shape: f32[16,128], index: 2, kind: output, shape index: {}]
  %s3 = sld [smem:[#allocation0]]
  $region22: #{tpu_custom_call.1} parent=0
    _
  %s5 = ssub.s32 1, %s3
  %s6 = scalar_select 0, %s5, %s3
  $region1: #{tpu_custom_call.1} parent=0
    #allocation2 [shape = 'u8[8192]{0}', space=vmem, size = 0x2000, scoped, tag = 'input window, operand 0, single buffered']
    #allocation3 [shape = 's32[1]{0}', space=sflag, size = 0x4, scoped, tag = 'scoped memory for tpu_custom_call.1']
    #allocation4 [shape = 's32[1]{0}', space=sflag, size = 0x4, scoped, tag = 'scoped memory for tpu_custom_call.1']
    #allocation5 [shape = 'u8[8192]{0}', space=vmem, size = 0x2000, scoped, tag = 'output window, operand 0, single buffered']
    %7 = vsyncpa [#allocation3], 0
    %8 = vsyncpa [#allocation4], 0
    // Predicated region
    $region2: #{tpu_custom_call.1} parent=1 // pred_check
      _
    $region3: #{tpu_custom_call.1} parent=1 // pred_check_branch
      %10 = sbr.rel (0) target = $region5
    $region4: #{tpu_custom_call.1} parent=1 // pred_region
      %s12 = ssub.s32 256, 256
      %13 = vsyncadd [#allocation3], %s12
      %s14 = sshll.u32 [#allocation2], 4
      %s15 = int_to_ptr.vmem [resolvable:$true] %s14
      %20 = dma.hbm_to_vmem [thread:$0]  %s0, 256, %s15, [#allocation3], 128, 128, 8
    $region5: #{tpu_custom_call.1} parent=1 // pred_fallthru
      _
    // Predicated region
    $region6: #{tpu_custom_call.1} parent=1 // pred_check
      _
    $region7: #{tpu_custom_call.1} parent=1 // pred_check_branch
      %22 = sbr.rel (0) target = $region9
    $region8: #{tpu_custom_call.1} parent=1 // pred_region
      _
    $region9: #{tpu_custom_call.1} parent=1 // pred_fallthru
      _
    // Predicated region
    $region10: #{tpu_custom_call.1} parent=1 // pred_check
      _
    $region11: #{tpu_custom_call.1} parent=1 // pred_check_branch
      %24 = sbr.rel (0) target = $region13
    $region12: #{tpu_custom_call.1} parent=1 // pred_region
      %25 = dma.done [#allocation3], 256
    $region13: #{tpu_custom_call.1} parent=1 // pred_fallthru
      _
    %v26 = vld [vmem:[#allocation2] sm:$0xff]
    %v27 = vld [vmem:[#allocation2 + $0x8] sm:$0xff]
    %v28 = vmul.f32 %v26, %v26
    %v29 = vmul.f32 %v27, %v27
    %30 = vadd.xlane.f32.xlu0 %v28
    %v31 = vpop.xlane.xlu0 %30
    %32 = vadd.xlane.f32.xlu0 %v29
    %v33 = vpop.xlane.xlu0 %32
    %v34 = vrcp.pop 128.0
    %v35 = vmul.f32 %v31, %v34
    %v36 = vmul.f32 %v33, %v34
    %v37 = vadd.f32 %v35, 1e-06
    %v38 = vadd.f32 %v36, 1e-06
    %v39 = vrsqrt.pop %v37
    %v40 = vrsqrt.pop %v38
    %v41 = vmul.f32 %v26, %v39
    %v42 = vmul.f32 %v27, %v40
    %v43 = vld [vmem:[%s1] sm:$0x1]
    %v45 = vlaneseq
    %v46 = vshrl.u32 %v45, 7
    %v47 = vsub.s32 0, %v46
    %v48 = vrot.slane %v43, %v47
    %v50 = vmul.f32 %v41, %v48
    %v51 = vmul.f32 %v42, %v48
    %52 = vst [vmem:[#allocation5] sm:$0xff] %v50
    %53 = vst [vmem:[#allocation5 + $0x8] sm:$0xff] %v51
    // Predicated region
    $region14: #{tpu_custom_call.1} parent=1 // pred_check
      _
    $region15: #{tpu_custom_call.1} parent=1 // pred_check_branch
      %55 = sbr.rel (0) target = $region17
    $region16: #{tpu_custom_call.1} parent=1 // pred_region
      %s57 = ssub.s32 256, 256
      %58 = vsyncadd [#allocation4], %s57
      %s59 = sshll.u32 [#allocation5], 4
      %s60 = int_to_ptr.vmem [resolvable:$true] %s59
      %65 = dma.vmem_to_hbm [thread:$0]  %s60, 256, %s2, [#allocation4], 128, 128, 8
    $region17: #{tpu_custom_call.1} parent=1 // pred_fallthru
      _
    // Predicated region
    $region18: #{tpu_custom_call.1} parent=1 // pred_check
      _
    $region19: #{tpu_custom_call.1} parent=1 // pred_check_branch
      %67 = sbr.rel (0) target = $region21
    $region20: #{tpu_custom_call.1} parent=1 // pred_region
      %68 = dma.done [#allocation4], 256
    $region21: #{tpu_custom_call.1} parent=1 // pred_fallthru
      _
    %69 = vsyncpa [#allocation3], 1
    %70 = vsyncpa [#allocation4], 1

</llo_original>
